<compile_context>
chip_gen: v6e
topology: v6e:2x2x1
jax: 0.10.0
libtpu: 0.0.40
codegen_flags: <defaults>
</compile_context>

<pallas_src>
import functools

import jax
import jax.numpy as jnp
from jax.experimental import pallas as pl
from jax.experimental.pallas import tpu as pltpu


def _round_up(x, m):
    return ((x + m - 1) // m) * m


def _highway_kernel(x_ref, w_ref, b_ref, o_ref, *, d_out):
    # x_ref: (TM, D_in)        row tile of flattened inputs (native dtype)
    # w_ref: (D_in, 2*D_out)   [W_lin | W_gate], VMEM-resident
    # b_ref: (1, 2*D_out)      [b_lin | b_gate], f32, VMEM-resident
    # o_ref: (TM, D_out)
    x = x_ref[...]

    # One fused MXU matmul for highway + gate projections, f32 accumulation,
    # operands kept in their native dtype (no per-step casts).
    hz = jnp.dot(x, w_ref[...], preferred_element_type=jnp.float32) + b_ref[...]

    h = jnp.maximum(hz[:, :d_out], 0.0)          # ReLU(highway)
    z = hz[:, d_out:]                            # gate pre-activation
    # sigmoid(z) = 1 / (1 + exp(-z)); exp and the approximate reciprocal both
    # run on the EUP slot (nearly free alongside the VPU work).
    g = pl.reciprocal(1.0 + jnp.exp(-z), approx=True)

    # h*g + x*(1-g)  ==  g*(h - x) + x   (one fewer multiply per element)
    o_ref[...] = (g * (h - x) + x).astype(o_ref.dtype)


def _scoped_vmem_limit_bytes():
    # ~75% of physical VMEM: ~96 MiB on v5e/v6e (128 MiB), ~48 MiB on v7x
    # (64 MiB / TC). Falls back to a safe 48 MiB if the query is unavailable.
    try:
        cap = int(pltpu.get_tpu_info().vmem_capacity_bytes)
    except Exception:
        cap = 64 * 1024 * 1024
    return int(min(cap * 3 // 4, 100 * 1024 * 1024))


_TARGET_X_TILE_BYTES = 4 * 1024 * 1024   # ~4 MiB of x per grid step
_MIN_GRID_STEPS = 4                      # keep v7x's 2 TCs fed + pipelined


@jax.jit
def highway_net(x, w_lin, b_lin, w_gate, b_gate):
    """HighwayNet forward.

    x:      (..., D_in)
    w_lin:  (D_in, D_out)   (== PyTorch linear.weight.T)
    b_lin:  (D_out,)
    w_gate: (D_in, D_out)   (== PyTorch gate.weight.T)
    b_gate: (D_out,)
    """
    d_in = x.shape[-1]
    d_out = w_lin.shape[1]
    assert d_in == d_out, "highway residual requires input_size == output_size"

    lead_shape = x.shape[:-1]
    x2 = x.reshape(-1, d_in)
    n = x2.shape[0]

    # Row tile: target ~4 MiB of x per step (multiple of 8 sublanes), but keep
    # at least _MIN_GRID_STEPS grid steps so the "parallel" axis can shard
    # across v7x's two TensorCores and the pipeline stays double-buffered.
    itemsize = jnp.dtype(x.dtype).itemsize
    rows_for_bytes = max(8, _TARGET_X_TILE_BYTES // max(1, d_in * itemsize))
    rows_for_steps = max(8, _round_up(pl.cdiv(n, _MIN_GRID_STEPS), 8))
    tm = min(_round_up(rows_for_bytes, 8), rows_for_steps)
    grid = (pl.cdiv(n, tm),)   # no padding: Pallas masks the ragged tail block

    # Fuse the two projections once in the wrapper: one matmul per tile.
    w_cat = jnp.concatenate([w_lin, w_gate], axis=1)                    # (D_in, 2*D_out)
    b_cat = jnp.concatenate([b_lin, b_gate]).reshape(1, 2 * d_out).astype(jnp.float32)

    flops = int(4 * n * d_in * d_out + 8 * n * d_out)
    transcendentals = int(2 * n * d_out)          # exp + approx reciprocal
    bytes_accessed = int(
        (n * d_in + n * d_out) * itemsize
        + 2 * d_in * d_out * jnp.dtype(w_cat.dtype).itemsize
        + 2 * d_out * 4
    )

    out = pl.pallas_call(
        functools.partial(_highway_kernel, d_out=d_out),
        out_shape=jax.ShapeDtypeStruct((n, d_out), x.dtype),
        grid_spec=pltpu.PrefetchScalarGridSpec(
            num_scalar_prefetch=0,
            grid=grid,
            in_specs=[
                pl.BlockSpec((tm, d_in), lambda i: (i, 0)),          # x row tile
                # Constant index maps -> weights/biases stay resident in VMEM
                # (DMA skipped after the first grid step).
                pl.BlockSpec((d_in, 2 * d_out), lambda i: (0, 0)),   # [W_lin|W_gate]
                pl.BlockSpec((1, 2 * d_out), lambda i: (0, 0)),      # [b_lin|b_gate]
            ],
            out_specs=pl.BlockSpec((tm, d_out), lambda i: (i, 0)),
        ),
        compiler_params=pltpu.CompilerParams(
            dimension_semantics=("parallel",),
            vmem_limit_bytes=_scoped_vmem_limit_bytes(),
        ),
        cost_estimate=pl.CostEstimate(
            flops=flops,
            transcendentals=transcendentals,
            bytes_accessed=bytes_accessed,
        ),
    )(x2, w_cat, b_cat)

    return out.reshape(lead_shape + (d_out,))


if __name__ == "__main__":
    # Small shapes consistent with the module: batch=2, seq=8, hidden=32.
    B, T, D = 2, 8, 32

    key = jax.random.PRNGKey(0)
    kx, kw1, kw2 = jax.random.split(key, 3)

    x = jax.random.normal(kx, (B, T, D), dtype=jnp.float32)

    # Parameters: random weights; biases follow the module's __init__
    # (linear.bias zeroed, gate.bias filled with -1).
    scale = 1.0 / jnp.sqrt(jnp.float32(D))
    w_lin = jax.random.normal(kw1, (D, D), dtype=jnp.float32) * scale
    w_gate = jax.random.normal(kw2, (D, D), dtype=jnp.float32) * scale
    b_lin = jnp.zeros((D,), dtype=jnp.float32)
    b_gate = jnp.full((D,), -1.0, dtype=jnp.float32)

    out = jax.block_until_ready(highway_net(x, w_lin, b_lin, w_gate, b_gate))

    # Plain-JAX reference (identical math to the PyTorch forward).
    h_ref = jax.nn.relu(x @ w_lin + b_lin)
    g_ref = jax.nn.sigmoid(x @ w_gate + b_gate)
    ref = h_ref * g_ref + x * (1.0 - g_ref)

    assert out.shape == (B, T, D)
    # Tolerance is slightly looser than 1e-5 because the gate uses the EUP's
    # approximate reciprocal (per perf review); error stays well under this.
    assert jnp.allclose(out, ref, atol=5e-3, rtol=5e-3), "mismatch vs reference"

    print("KERNEL_OK")
</pallas_src>

<mosaic_0001>
module attributes {stable_mosaic.version = 11 : i64} {
  func.func @_highway_kernel(%arg0: i32, %arg1: memref<8x32xf32, #tpu.memory_space<vmem>>, %arg2: memref<32x64xf32, #tpu.memory_space<vmem>>, %arg3: memref<1x64xf32, #tpu.memory_space<vmem>>, %arg4: memref<8x32xf32, #tpu.memory_space<vmem>>) attributes {dimension_semantics = [#tpu.dimension_semantics<parallel>], iteration_bounds = array<i64: 2>, scalar_prefetch = 0 : i64, scratch_operands = 0 : i64, tpu.core_type = #tpu.core_type<tc>, window_params = [{transform_indices = @transform_0, window_bounds = array<i64: 8, 32>}, {pipeline_mode = #tpu.pipeline_mode<synchronous>, transform_indices = @transform_1, window_bounds = array<i64: 32, 64>}, {pipeline_mode = #tpu.pipeline_mode<synchronous>, transform_indices = @transform_2, window_bounds = array<i64: 1, 64>}, {transform_indices = @transform_3, window_bounds = array<i64: 8, 32>}]} {
    %c0 = arith.constant 0 : index
    %c0_0 = arith.constant 0 : index
    %0 = vector.load %arg1[%c0, %c0_0] : memref<8x32xf32, #tpu.memory_space<vmem>>, vector<8x32xf32>
    %c0_1 = arith.constant 0 : index
    %c0_2 = arith.constant 0 : index
    %1 = vector.load %arg2[%c0_1, %c0_2] : memref<32x64xf32, #tpu.memory_space<vmem>>, vector<32x64xf32>
    %cst = arith.constant dense<0.000000e+00> : vector<8x64xf32>
    %2 = tpu.matmul %0, %1, %cst {dimension_numbers = #tpu.dot_dimension_numbers<[1], [0], [0], [1], [0, 0, 1, 1], [], []>} : vector<8x32xf32>, vector<32x64xf32>, vector<8x64xf32> -> vector<8x64xf32>
    %c0_3 = arith.constant 0 : index
    %c0_4 = arith.constant 0 : index
    %3 = vector.load %arg3[%c0_3, %c0_4] : memref<1x64xf32, #tpu.memory_space<vmem>>, vector<1x64xf32>
    %4 = vector.broadcast %3 : vector<1x64xf32> to vector<8x64xf32>
    %5 = arith.addf %2, %4 : vector<8x64xf32>
    %6 = vector.extract_strided_slice %5 {offsets = [0, 0], sizes = [8, 32], strides = [1, 1]} : vector<8x64xf32> to vector<8x32xf32>
    %cst_5 = arith.constant 0.000000e+00 : f32
    %7 = vector.broadcast %cst_5 : f32 to vector<8x32xf32>
    %8 = arith.maximumf %6, %7 : vector<8x32xf32>
    %9 = vector.extract_strided_slice %5 {offsets = [0, 32], sizes = [8, 32], strides = [1, 1]} : vector<8x64xf32> to vector<8x32xf32>
    %cst_6 = arith.constant 0.000000e+00 : f32
    %10 = vector.broadcast %cst_6 : f32 to vector<8x32xf32>
    %11 = arith.subf %10, %9 : vector<8x32xf32>
    %12 = math.exp %11 : vector<8x32xf32>
    %cst_7 = arith.constant 1.000000e+00 : f32
    %13 = vector.broadcast %cst_7 : f32 to vector<8x32xf32>
    %14 = arith.addf %13, %12 : vector<8x32xf32>
    %15 = tpu.reciprocal %14 {approx = true} : vector<8x32xf32> -> vector<8x32xf32>
    %16 = arith.subf %8, %0 : vector<8x32xf32>
    %17 = arith.mulf %15, %16 : vector<8x32xf32>
    %18 = arith.addf %17, %0 : vector<8x32xf32>
    %c0_8 = arith.constant 0 : index
    %c0_9 = arith.constant 0 : index
    %19 = vector.load %arg4[%c0_8, %c0_9] : memref<8x32xf32, #tpu.memory_space<vmem>>, vector<8x32xf32>
    tpu.vector_store %arg4[%c0_8, %c0_9], %18 {strides = array<i32>} : memref<8x32xf32, #tpu.memory_space<vmem>>, vector<8x32xf32>,
    return
  }
  func.func @transform_0(%arg0: i32) -> (i32, i32) {
    %c0_i32 = arith.constant 0 : i32
    %c0_i32_0 = arith.constant 0 : i32
    return %arg0, %c0_i32 : i32, i32
  }
  func.func @transform_1(%arg0: i32) -> (i32, i32) {
    %c0_i32 = arith.constant 0 : i32
    %c0_i32_0 = arith.constant 0 : i32
    %c0_i32_1 = arith.constant 0 : i32
    return %c0_i32, %c0_i32_0 : i32, i32
  }
  func.func @transform_2(%arg0: i32) -> (i32, i32) {
    %c0_i32 = arith.constant 0 : i32
    %c0_i32_0 = arith.constant 0 : i32
    %c0_i32_1 = arith.constant 0 : i32
    return %c0_i32, %c0_i32_0 : i32, i32
  }
  func.func @transform_3(%arg0: i32) -> (i32, i32) {
    %c0_i32 = arith.constant 0 : i32
    %c0_i32_0 = arith.constant 0 : i32
    return %arg0, %c0_i32 : i32, i32
  }
}

</mosaic_0001>

<llo_original>
// kernel: highway_net.1
$region0: #{highway_net.1}
  #allocation0 [shape = 'u32[]', space=smem, size = 0x4, offset = 0x4, fixed_abs, tag = 'smem constant byte address 0x4 - core index']
  #allocation1 [shape = 'u32[144,128]{1,0:T(1,128)}', space=vmem, size = 0x12000, scoped, tag = 'internal scratch']
  %s0 = inlined_call_operand.vmem [shape: f32[16,32], index: 0, kind: input, shape index: {}]
  %s1 = inlined_call_operand.vmem [shape: f32[32,64], index: 1, kind: input, shape index: {}]
  %s2 = inlined_call_operand.vmem [shape: f32[1,64], index: 2, kind: input, shape index: {}]
  %s3 = inlined_call_operand.hbm [shape: f32[16,32], index: 3, kind: output, shape index: {}]
  %s4 = sld [smem:[#allocation0]]
  $region45: #{highway_net.1} parent=0
    _
  %s6 = ssub.s32 1, %s4
  %s7 = scalar_select 0, %s6, %s4
  $region1: #{highway_net.1} parent=0
    #allocation2 [shape = 'u8[8192]{0}', space=vmem, size = 0x2000, scoped, tag = 'output window, operand 0']
    #allocation3 [shape = 's32[2]{0}', space=sflag, size = 0x8, scoped, tag = 'scoped memory for highway_net.1']
    %8 = vsyncpa [#allocation3], 0
    %s9 = scalar_lea.sflag [#allocation3], 1
    %10 = vsyncpa %s9, 0
    loop: start=0, step=1, limit=4
    $region2: #{highway_net.1} parent=1 // loop_pre_header
      _
    $region3: #{highway_net.1} parent=1 // loop_header
      %s12 = sphi 0, %s16
      %p13 = scmp.ge.s32.totalorder %s12, 4
      %s22 = sphi 0, %s24
      %s25 = sphi 0, %s22
      %s26 = sphi 0, %s25
      %s42 = sphi 0, %s26
      %s46 = sphi 0, %s46
      %s48 = sphi 0, %s46
      %s49 = sphi 0, %s48
      %s63 = sphi 0, %s49
      %s67 = sphi 0, %s67
      %s69 = sphi 0, %s67
      %s70 = sphi 0, %s69
      %s84 = sphi 0, %s70
      %s90 = sphi 0, %s92
      %s93 = sphi 0, %s90
      %s94 = sphi 0, %s93
      %s110 = sphi 0, %s94
    $region4: #{highway_net.1} parent=1 // loop_header_branch
      %15 = sbr.rel (%p13) target = $region8
    $region5: #{highway_net.1} parent=1 // loop_body
      %s17 = ssub.s32 %s12, 1
      %s18 = ssub.s32 %s12, 2
      %s19 = sadd.s32 %s12, 1
      %s20 = ssub.s32 %s12, %s19
      %p21 = scmp.eq.s32.totalorder %s20, 0
      %s23 = sadd.s32 %s22, 1
      %s24 = scalar_select %p21, %s22, %s23
      %p27 = pneg %p21
      %p28 = scmp.eq.s32.totalorder %s12, 1
      %p29 = por %p27, %p28
      %p30 = scmp.ne.s32.totalorder %s22, %s25
      %p31 = scmp.eq.s32.totalorder %s12, 0
      %p32 = por %p30, %p31
      %p33 = scmp.ne.s32.totalorder %s22, %s25
      %p34 = scmp.eq.s32.totalorder %s17, 1
      %p35 = por %p33, %p34
      %p36 = scmp.ne.s32.totalorder %s25, %s26
      %p37 = scmp.eq.s32.totalorder %s17, 0
      %p38 = por %p36, %p37
      %p39 = scmp.ne.s32.totalorder %s25, %s26
      %p40 = scmp.eq.s32.totalorder %s18, 1
      %p41 = por %p39, %p40
      %p43 = scmp.ne.s32.totalorder %s26, %s42
      %p44 = scmp.eq.s32.totalorder %s18, 0
      %p45 = por %p43, %p44
      %s47 = sadd.s32 %s46, 1
      %p50 = scmp.eq.s32.totalorder %s12, 1
      %p51 = scmp.ne.s32.totalorder %s46, %s48
      %p52 = scmp.eq.s32.totalorder %s12, 0
      %p53 = por %p51, %p52
      %p54 = scmp.ne.s32.totalorder %s46, %s48
      %p55 = scmp.eq.s32.totalorder %s17, 1
      %p56 = por %p54, %p55
      %p57 = scmp.ne.s32.totalorder %s48, %s49
      %p58 = scmp.eq.s32.totalorder %s17, 0
      %p59 = por %p57, %p58
      %p60 = scmp.ne.s32.totalorder %s48, %s49
      %p61 = scmp.eq.s32.totalorder %s18, 1
      %p62 = por %p60, %p61
      %p64 = scmp.ne.s32.totalorder %s49, %s63
      %p65 = scmp.eq.s32.totalorder %s18, 0
      %p66 = por %p64, %p65
      %s68 = sadd.s32 %s67, 1
      %p71 = scmp.eq.s32.totalorder %s12, 1
      %p72 = scmp.ne.s32.totalorder %s67, %s69
      %p73 = scmp.eq.s32.totalorder %s12, 0
      %p74 = por %p72, %p73
      %p75 = scmp.ne.s32.totalorder %s67, %s69
      %p76 = scmp.eq.s32.totalorder %s17, 1
      %p77 = por %p75, %p76
      %p78 = scmp.ne.s32.totalorder %s69, %s70
      %p79 = scmp.eq.s32.totalorder %s17, 0
      %p80 = por %p78, %p79
      %p81 = scmp.ne.s32.totalorder %s69, %s70
      %p82 = scmp.eq.s32.totalorder %s18, 1
      %p83 = por %p81, %p82
      %p85 = scmp.ne.s32.totalorder %s70, %s84
      %p86 = scmp.eq.s32.totalorder %s18, 0
      %p87 = por %p85, %p86
      %s88 = ssub.s32 %s12, %s19
      %p89 = scmp.eq.s32.totalorder %s88, 0
      %s91 = sadd.s32 %s90, 1
      %s92 = scalar_select %p89, %s90, %s91
      %p95 = pneg %p89
      %p96 = scmp.eq.s32.totalorder %s12, 1
      %p97 = por %p95, %p96
      %p98 = scmp.ne.s32.totalorder %s90, %s93
      %p99 = scmp.eq.s32.totalorder %s12, 0
      %p100 = por %p98, %p99
      %p101 = scmp.ne.s32.totalorder %s90, %s93
      %p102 = scmp.eq.s32.totalorder %s17, 1
      %p103 = por %p101, %p102
      %p104 = scmp.ne.s32.totalorder %s93, %s94
      %p105 = scmp.eq.s32.totalorder %s17, 0
      %p106 = por %p104, %p105
      %p107 = scmp.ne.s32.totalorder %s93, %s94
      %p108 = scmp.eq.s32.totalorder %s18, 1
      %p109 = por %p107, %p108
      %p111 = scmp.ne.s32.totalorder %s94, %s110
      %p112 = scmp.eq.s32.totalorder %s18, 0
      %p113 = por %p111, %p112
      %p114 = scmp.le.s32.totalorder 1, %s12
      %p115 = scmp.lt.s32.totalorder %s12, 3
      %p116 = pnand %p114, %p115
      %p117 = pneg %p116
      // Predicated region
      $region9: #{highway_net.1} parent=5 // pred_check
        _
      $region10: #{highway_net.1} parent=5 // pred_check_branch
        %119 = sbr.rel (%p116) target = $region12
      $region11: #{highway_net.1} parent=5 // pred_region
        %s120 = ssub.s32 %s12, 1
        // Predicated region
        $region13: #{highway_net.1} parent=11 // pred_check
          %p121 = pneg %p59
        $region14: #{highway_net.1} parent=11 // pred_check_branch
          %123 = sbr.rel (%p121) target = $region16
        $region15: #{highway_net.1} parent=11 // pred_region
          _
        $region16: #{highway_net.1} parent=11 // pred_fallthru
          _
        // Predicated region
        $region17: #{highway_net.1} parent=11 // pred_check
          %p124 = pneg %p80
        $region18: #{highway_net.1} parent=11 // pred_check_branch
          %126 = sbr.rel (%p124) target = $region20
        $region19: #{highway_net.1} parent=11 // pred_region
          _
        $region20: #{highway_net.1} parent=11 // pred_fallthru
          _
      $region12: #{highway_net.1} parent=5 // pred_fallthru
        _
      %p127 = scmp.lt.s32.totalorder %s12, 2
      // Predicated region
      $region21: #{highway_net.1} parent=5 // pred_check
        %p128 = pneg %p127
      $region22: #{highway_net.1} parent=5 // pred_check_branch
        %130 = sbr.rel (%p128) target = $region24
      $region23: #{highway_net.1} parent=5 // pred_region
        // Predicated region
        $region25: #{highway_net.1} parent=23 // pred_check
          %p131 = pneg %p32
        $region26: #{highway_net.1} parent=23 // pred_check_branch
          %133 = sbr.rel (%p131) target = $region28
        $region27: #{highway_net.1} parent=23 // pred_region
          %p134 = scmp.lt.s32.totalorder %s12, 1
          %s135 = scalar_select %p134, %s12, 1
          %s136 = smul.addr %s135, 8
          %s137 = scalar_lea.vmem %s0, %s136
        $region28: #{highway_net.1} parent=23 // pred_fallthru
          _
      $region24: #{highway_net.1} parent=5 // pred_fallthru
        _
      %p138 = scmp.le.s32.totalorder 1, %s12
      %p139 = scmp.lt.s32.totalorder %s12, 3
      %p140 = pnand %p138, %p139
      %p141 = pneg %p140
      // Predicated region
      $region29: #{highway_net.1} parent=5 // pred_check
        _
      $region30: #{highway_net.1} parent=5 // pred_check_branch
        %143 = sbr.rel (%p140) target = $region32
      $region31: #{highway_net.1} parent=5 // pred_region
        %s144 = ssub.s32 %s12, 1
        %p145 = scmp.lt.s32.totalorder %s17, 1
        %s146 = scalar_select %p145, %s17, 1
        %s147 = smul.addr %s146, 8
        %s148 = scalar_lea.vmem %s0, %s147
        %p149 = pneg %p38
        %p150 = pneg %p35
        %p151 = pneg %p59
        %p152 = pneg %p56
        %p153 = pneg %p80
        %p154 = pneg %p77
        %p155 = pneg %p106
        %p156 = pneg %p103
        %s157 = sand.u32 %s93, 1
        %s158 = scalar_lea.sflag [#allocation3], %s157
        %s159 = sand.u32 %s93, 1
        %s160 = smul.addr %s159, 8
        %s161 = scalar_lea.vmem [#allocation2], %s160
        %p162 = scmp.lt.s32.totalorder %s17, 1
        %s163 = scalar_select %p162, %s17, 1
        %s164 = smul.addr %s163, 8
        %s165 = scalar_lea.vmem %s0, %s164
        %v166 = vld [vmem:[%s165] sm:$0xff]
        %v167 = vld [vmem:[%s1] sm:$0xff]
        %v168 = vld [vmem:[%s1 + $0x8] sm:$0xff]
        %v169 = vld [vmem:[%s1 + $0x10] sm:$0xff]
        %v170 = vld [vmem:[%s1 + $0x18] sm:$0xff]
        %v171 = vld [vmem:[%s2] sm:$0x1]
        %v173 = vlaneseq
        %v174 = vshrl.u32 %v173, 7
        %v175 = vsub.s32 0, %v174
        %v176 = vrot.slane %v171, %v175
        %vm178 = vcmask 261120
        %v180 = vsel %vm178, %v166, 0
        %182 = vmatprep.subr.mxu0 0.0
        %183 = vmatpush1.msra.mxu0 0.0
        %184 = vmatprep.subr.mxu0 0.0
        %185 = vmatpush1.msra.mxu0 0.0
        %186 = vmatprep.subr.mxu0 0.0
        %187 = vmatpush1.msra.mxu0 0.0
        %188 = vmatprep.subr.mxu0 0.0
        %189 = vmatpush1.msra.mxu0 0.0
        %190 = vmatprep.subr.mxu0 0.0
        %191 = vmatpush1.msra.mxu0 0.0
        %192 = vmatprep.subr.mxu0 0.0
        %193 = vmatpush1.msra.mxu0 0.0
        %194 = vmatprep.subr.mxu0 0.0
        %195 = vmatpush1.msra.mxu0 0.0
        %196 = vmatprep.subr.mxu0 0.0
        %197 = vmatpush1.msra.mxu0 0.0
        %198 = vmatprep.subr.mxu0 0.0
        %199 = vmatpush1.msra.mxu0 0.0
        %200 = vmatprep.subr.mxu0 0.0
        %201 = vmatpush1.msra.mxu0 0.0
        %202 = vmatprep.subr.mxu0 0.0
        %203 = vmatpush1.msra.mxu0 0.0
        %204 = vmatprep.subr.mxu0 0.0
        %205 = vmatpush1.msra.mxu0 0.0
        %206 = vmatprep.subr.mxu0 0.0
        %207 = vmatpush1.msra.mxu0 %v170
        %208 = vmatprep.subr.mxu0 0.0
        %209 = vmatpush1.msra.mxu0 %v169
        %210 = vmatprep.subr.mxu0 0.0
        %211 = vmatpush1.msra.mxu0 %v168
        %212 = vmatprep.subr.mxu0 0.0
        %213 = vmatpush1.msra.mxu0 %v167
        %214 = vmatprep.subr.mxu0 0.0
        %215 = vmatpush2.msra.mxu0 0.0
        %216 = vmatprep.subr.mxu0 0.0
        %217 = vmatpush2.msra.mxu0 0.0
        %218 = vmatprep.subr.mxu0 0.0
        %219 = vmatpush2.msra.mxu0 0.0
        %220 = vmatprep.subr.mxu0 0.0
        %221 = vmatpush2.msra.mxu0 0.0
        %222 = vmatprep.subr.mxu0 0.0
        %223 = vmatpush2.msra.mxu0 0.0
        %224 = vmatprep.subr.mxu0 0.0
        %225 = vmatpush2.msra.mxu0 0.0
        %226 = vmatprep.subr.mxu0 0.0
        %227 = vmatpush2.msra.mxu0 0.0
        %228 = vmatprep.subr.mxu0 0.0
        %229 = vmatpush2.msra.mxu0 0.0
        %230 = vmatprep.subr.mxu0 0.0
        %231 = vmatpush2.msra.mxu0 0.0
        %232 = vmatprep.subr.mxu0 0.0
        %233 = vmatpush2.msra.mxu0 0.0
        %234 = vmatprep.subr.mxu0 0.0
        %235 = vmatpush2.msra.mxu0 0.0
        %236 = vmatprep.subr.mxu0 0.0
        %237 = vmatpush2.msra.mxu0 0.0
        %238 = vmatprep.subr.mxu0 0.0
        %239 = vmatpush2.msra.mxu0 0.0
        %240 = vmatprep.subr.mxu0 0.0
        %241 = vmatpush2.msra.mxu0 0.0
        %242 = vmatprep.subr.mxu0 0.0
        %243 = vmatpush2.msra.mxu0 0.0
        %244 = vmatprep.subr.mxu0 0.0
        %245 = vmatpush2.msra.mxu0 0.0
        %246 = vmatprep.mubr.f32.mxu0 0.0
        %247 = vmatmul.mubr.f32.gmra.mxu0 %v180
        %v248 = vpop.f32.mrf.mxu0
        %v249 = vadd.f32 %v176, %v248
        %v250 = vpop.f32.mrf.mxu0
        %251 = vdwg.mxu0
        %v252 = vmax.f32 %v249, 0.0
        %v253 = vsub.f32 0.0, %v249
        %v254 = vmul.f32 %v253, 1.442695
        %v255 = vpow.pop %v254
        %v256 = vadd.f32 %v255, 1.0
        %v257 = vrcp.pop %v256
        %v258 = vsub.f32 %v252, %v166
        %260 = vrot.lane.b32.xlu0 %v258, 32
        %v261 = vpop.permute.xlu0 %260
        %v263 = vmul.f32 %v257, %v261
        %264 = vrot.lane.b32.xlu0 %v166, 32
        %v265 = vpop.permute.xlu0 %264
        %v267 = vadd.f32 %v263, %v265
        %269 = vrot.lane.b32.xlu0 %v267, 96
        %v270 = vpop.permute.xlu0 %269
        %272 = vst.msk [vmem:[%s161] sm:$0xff] %vm178, %v270
        %s273 = sand.u32 %s93, 1
        %s274 = scalar_lea.sflag [#allocation3], %s273
        %s275 = sand.u32 %s93, 1
        %s276 = smul.addr %s275, 8
        %s277 = scalar_lea.vmem [#allocation2], %s276
        // Predicated region
        $region33: #{highway_net.1} parent=31 // pred_check
          %p278 = pneg %p103
        $region34: #{highway_net.1} parent=31 // pred_check_branch
          %280 = sbr.rel (%p278) target = $region36
        $region35: #{highway_net.1} parent=31 // pred_region
          %s282 = ssub.s32 128, 128
          %283 = vsyncadd %s274, %s282
          %s284 = smul.addr %s17, 128
          %s285 = scalar_lea.hbm %s3, %s284
          %s287 = sshll.u32 %s277, 4
          %s288 = int_to_ptr.vmem [resolvable:$true] %s287
          %290 = dma.vmem_to_hbm [thread:$0]  %s288, 128, %s285, %s274
        $region36: #{highway_net.1} parent=31 // pred_fallthru
          _
      $region32: #{highway_net.1} parent=5 // pred_fallthru
        _
      %p291 = scmp.le.s32.totalorder 2, %s12
      // Predicated region
      $region37: #{highway_net.1} parent=5 // pred_check
        %p292 = pneg %p291
      $region38: #{highway_net.1} parent=5 // pred_check_branch
        %294 = sbr.rel (%p292) target = $region40
      $region39: #{highway_net.1} parent=5 // pred_region
        %s295 = ssub.s32 %s12, 2
        // Predicated region
        $region41: #{highway_net.1} parent=39 // pred_check
          %p296 = pneg %p109
        $region42: #{highway_net.1} parent=39 // pred_check_branch
          %298 = sbr.rel (%p296) target = $region44
        $region43: #{highway_net.1} parent=39 // pred_region
          %s299 = sand.u32 %s94, 1
          %s300 = scalar_lea.sflag [#allocation3], %s299
          %s301 = sand.u32 %s94, 1
          %s302 = smul.addr %s301, 8
          %s303 = scalar_lea.vmem [#allocation2], %s302
          %304 = dma.done %s300, 128
        $region44: #{highway_net.1} parent=39 // pred_fallthru
          _
      $region40: #{highway_net.1} parent=5 // pred_fallthru
        _
    $region6: #{highway_net.1} parent=1 // loop_footer
      %s16 = sadd.s32 1, %s12
    $region7: #{highway_net.1} parent=1 // loop_footer_branch
      %11 = sbr.rel target = $region3
    $region8: #{highway_net.1} parent=1 // loop_exit
      _
    %305 = vsyncpa [#allocation3], 1
    %s306 = scalar_lea.sflag [#allocation3], 1
    %307 = vsyncpa %s306, 1

</llo_original>
